<compile_context>
chip_gen: v7x
topology: tpu7x:2x2x1
jax: 0.10.0
libtpu: 0.0.40
codegen_flags: <defaults>
</compile_context>

<pallas_src>
import jax
import jax.numpy as jnp
from jax.experimental import pallas as pl
from jax.experimental.pallas import tpu as pltpu


def cbow_output_kernel(hidden_ref, w2t_ref, out_ref):
    """One grid step = one vocab tile of the output layer.

    hidden_ref : (1, E_pad) bf16 — constant block index -> fetched once, resident
    w2t_ref    : (E_pad, TV) bf16 tile of W2^T, auto-pipelined over the vocab axis
    out_ref    : (1, TV) f32 output tile (lane-dense -> unmasked stores)
    """
    out_ref[...] = jnp.dot(
        hidden_ref[...], w2t_ref[...], preferred_element_type=jnp.float32
    )


def _round_up(x, m):
    return (x + m - 1) // m * m


def _choose_vocab_tile(v_pad128, e_pad, target_bytes=4 << 20):
    """Pick TV so each grid step streams ~target_bytes of bf16 W2^T."""
    tv = max(128, (target_bytes // (e_pad * 2)) // 128 * 128)
    tv = min(tv, 65536)          # keep tile shapes sane for tiny E
    tv = min(tv, v_pad128)       # never exceed the (128-padded) vocab
    return tv


def prepare_cbow_weights(w1, w2):
    """One-time weight preparation (module init / weight-load time).

    w1 : (E, V) = input_to_hidden.weight   (PyTorch layout)
    w2 : (V, E) = hidden_to_output.weight  (PyTorch layout)
    """
    e, v = w1.shape
    assert w2.shape == (v, e)

    e_pad = _round_up(e, 16)          # bf16 sublane packing: 16 rows per vreg
    v_pad128 = _round_up(v, 128)      # lane-dense output stores
    tv = _choose_vocab_tile(v_pad128, e_pad)
    v_pad = _round_up(v_pad128, tv)   # vocab tile divides the padded vocab

    # Embedding table = W1^T rows, zero-padded on E (padding never affects the dot).
    w1t_pad = jnp.pad(w1.T, ((0, 0), (0, e_pad - e)))                              # (V, E_pad) f32
    # W2^T padded + cast to bf16 once, kept at rest in the streamed layout.
    w2t_bf16 = jnp.pad(w2.T, ((0, e_pad - e), (0, v_pad - v))).astype(jnp.bfloat16)  # (E_pad, V_pad)

    return dict(w1t_pad=w1t_pad, w2t_bf16=w2t_bf16,
                v=v, e=e, e_pad=e_pad, v_pad=v_pad, tv=tv)


def cbow_forward_from_indices(params, idx):
    """idx: (N,) int32 context word ids -> (1, V) f32 logits."""
    w1t = params["w1t_pad"]
    w2t = params["w2t_bf16"]
    e_pad, v_pad, tv, v = params["e_pad"], params["v_pad"], params["tv"], params["v"]

    # hidden = mean of the N gathered embedding rows.  N*E elements: trivial,
    # done in plain JAX so the kernel's vocab sweep has no serial j==0 stage.
    hidden = jnp.mean(jnp.take(w1t, idx, axis=0), axis=0, keepdims=True)  # (1, E_pad) f32
    hidden_bf16 = hidden.astype(jnp.bfloat16)  # cast once, not per vocab tile

    out = pl.pallas_call(
        cbow_output_kernel,
        out_shape=jax.ShapeDtypeStruct((1, v_pad), jnp.float32),
        grid=(v_pad // tv,),
        in_specs=[
            # hidden: constant block index -> DMA'd once, stays resident in VMEM.
            pl.BlockSpec((1, e_pad), lambda j: (0, 0)),
            # W2^T: lane-dense bf16 tile, auto double-buffered over the vocab axis.
            pl.BlockSpec((e_pad, tv), lambda j: (0, j)),
        ],
        out_specs=pl.BlockSpec((1, tv), lambda j: (0, j)),
        compiler_params=pltpu.CompilerParams(
            # Vocab tiles are fully independent now (hidden is a read-only input),
            # so "parallel" lets v7x shard the W2 stream across its 2 TensorCores.
            dimension_semantics=("parallel",),
        ),
    )(hidden_bf16, w2t)
    return out[:, :v]


def cbow_forward(params, x_onehot):
    """Same interface as the PyTorch forward: x_onehot is (N, V) one-hot rows."""
    idx = jnp.argmax(x_onehot, axis=-1).astype(jnp.int32)  # tiny JAX glue
    return cbow_forward_from_indices(params, idx)


if __name__ == "__main__":
    # Vocabulary derived from the source script's sentences -> 9 unique words.
    voc_size = 9
    embedding_size = 2
    n_context = 4  # CBOW context words (window of 2 on each side)

    key = jax.random.PRNGKey(0)
    k1, k2, k3 = jax.random.split(key, 3)

    # Weights in PyTorch layout:
    #   w1 == input_to_hidden.weight   (E, V)
    #   w2 == hidden_to_output.weight  (V, E)
    w1 = jax.random.normal(k1, (embedding_size, voc_size), dtype=jnp.float32)
    w2 = jax.random.normal(k2, (voc_size, embedding_size), dtype=jnp.float32)

    # One-time prep: transpose + pad + bf16 cast of W2^T (NOT in the hot path).
    params = prepare_cbow_weights(w1, w2)

    idx = jax.random.randint(k3, (n_context,), 0, voc_size)
    x = jax.nn.one_hot(idx, voc_size, dtype=jnp.float32)  # PyTorch-style input

    out = cbow_forward(params, x)
    out = jax.block_until_ready(out)
    assert out.shape == (1, voc_size)

    # Reference with the same bf16 weight/hidden quantization used in the kernel
    # (isolates kernel math from the intentional bf16 precision trade).
    hidden_ref = jnp.mean(x @ w1.T, axis=0, keepdims=True)      # == mean(X @ W1.T, dim=0)
    ref_bf16 = jnp.dot(
        hidden_ref.astype(jnp.bfloat16),
        w2.T.astype(jnp.bfloat16),
        preferred_element_type=jnp.float32,
    )
    assert jnp.allclose(out, ref_bf16, atol=1e-3, rtol=1e-3)

    # Looser check against the pure-f32 PyTorch semantics.
    ref_f32 = hidden_ref @ w2.T
    assert jnp.allclose(out, ref_f32, atol=5e-2, rtol=5e-2)

    print("KERNEL_OK")
</pallas_src>

<mosaic_0001>
module attributes {stable_mosaic.version = 11 : i64} {
  func.func @cbow_output_kernel(%arg0: i32, %arg1: memref<1x16xbf16, #tpu.memory_space<vmem>>, %arg2: memref<16x128xbf16, #tpu.memory_space<vmem>>, %arg3: memref<1x128xf32, #tpu.memory_space<vmem>>) attributes {dimension_semantics = [#tpu.dimension_semantics<parallel>], iteration_bounds = array<i64: 1>, scalar_prefetch = 0 : i64, scratch_operands = 0 : i64, tpu.core_type = #tpu.core_type<tc>, window_params = [{pipeline_mode = #tpu.pipeline_mode<synchronous>, transform_indices = @transform_0, window_bounds = array<i64: 1, 16>}, {transform_indices = @transform_1, window_bounds = array<i64: 16, 128>}, {transform_indices = @transform_2, window_bounds = array<i64: 1, 128>}]} {
    %c0 = arith.constant 0 : index
    %c0_0 = arith.constant 0 : index
    %0 = vector.load %arg1[%c0, %c0_0] : memref<1x16xbf16, #tpu.memory_space<vmem>>, vector<1x16xbf16>
    %c0_1 = arith.constant 0 : index
    %c0_2 = arith.constant 0 : index
    %1 = vector.load %arg2[%c0_1, %c0_2] : memref<16x128xbf16, #tpu.memory_space<vmem>>, vector<16x128xbf16>
    %cst = arith.constant dense<0.000000e+00> : vector<1x128xf32>
    %2 = tpu.matmul %0, %1, %cst {dimension_numbers = #tpu.dot_dimension_numbers<[1], [0], [0], [1], [0, 0, 1, 1], [], []>} : vector<1x16xbf16>, vector<16x128xbf16>, vector<1x128xf32> -> vector<1x128xf32>
    %c0_3 = arith.constant 0 : index
    %c0_4 = arith.constant 0 : index
    %3 = vector.load %arg3[%c0_3, %c0_4] : memref<1x128xf32, #tpu.memory_space<vmem>>, vector<1x128xf32>
    tpu.vector_store %arg3[%c0_3, %c0_4], %2 {strides = array<i32>} : memref<1x128xf32, #tpu.memory_space<vmem>>, vector<1x128xf32>,
    return
  }
  func.func @transform_0(%arg0: i32) -> (i32, i32) {
    %c0_i32 = arith.constant 0 : i32
    %c0_i32_0 = arith.constant 0 : i32
    %c0_i32_1 = arith.constant 0 : i32
    return %c0_i32, %c0_i32_0 : i32, i32
  }
  func.func @transform_1(%arg0: i32) -> (i32, i32) {
    %c0_i32 = arith.constant 0 : i32
    %c0_i32_0 = arith.constant 0 : i32
    return %c0_i32, %arg0 : i32, i32
  }
  func.func @transform_2(%arg0: i32) -> (i32, i32) {
    %c0_i32 = arith.constant 0 : i32
    %c0_i32_0 = arith.constant 0 : i32
    return %c0_i32, %arg0 : i32, i32
  }
}

</mosaic_0001>

<llo_original>
// kernel: tpu_custom_call.1
$region0: #{tpu_custom_call.1}
  #allocation0 [shape = 'u32[]', space=smem, size = 0x4, offset = 0x4, fixed_abs, tag = 'smem constant byte address 0x4 - core index']
  #allocation1 [shape = 'u32[144,128]{1,0:T(1,128)}', space=vmem, size = 0x12000, scoped, tag = 'internal scratch']
  %s0 = inlined_call_operand.hbm [shape: bf16[1,16], index: 0, kind: input, shape index: {}]
  %s1 = inlined_call_operand.hbm [shape: bf16[16,128], index: 1, kind: input, shape index: {}]
  %s2 = inlined_call_operand.hbm [shape: f32[1,128], index: 2, kind: output, shape index: {}]
  %s3 = sld [smem:[#allocation0]]
  $region26: #{tpu_custom_call.1} parent=0
    _
  %s5 = ssub.s32 1, %s3
  %s6 = scalar_select 0, %s5, %s3
  $region1: #{tpu_custom_call.1} parent=0
    #allocation2 [shape = 'u8[512]{0}', space=vmem, size = 0x400, scoped, tag = 'input window, operand 0, single buffered']
    #allocation3 [shape = 's32[1]{0}', space=sflag, size = 0x4, scoped, tag = 'scoped memory for tpu_custom_call.1']
    #allocation4 [shape = 's32[1]{0}', space=sflag, size = 0x4, scoped, tag = 'scoped memory for tpu_custom_call.1']
    #allocation5 [shape = 'u8[4096]{0}', space=vmem, size = 0x1000, scoped, tag = 'input window, operand 1, single buffered']
    #allocation6 [shape = 's32[1]{0}', space=sflag, size = 0x4, scoped, tag = 'scoped memory for tpu_custom_call.1']
    #allocation7 [shape = 'u8[512]{0}', space=vmem, size = 0x400, scoped, tag = 'output window, operand 0, single buffered']
    %7 = vsyncpa [#allocation3], 0
    %8 = vsyncpa [#allocation6], 0
    %9 = vsyncpa [#allocation4], 0
    // Predicated region
    $region2: #{tpu_custom_call.1} parent=1 // pred_check
      _
    $region3: #{tpu_custom_call.1} parent=1 // pred_check_branch
      %11 = sbr.rel (0) target = $region5
    $region4: #{tpu_custom_call.1} parent=1 // pred_region
      %s13 = ssub.s32 16, 16
      %14 = vsyncadd [#allocation3], %s13
      %s16 = sshll.u32 [#allocation2], 4
      %s17 = int_to_ptr.vmem [resolvable:$true] %s16
      %19 = dma.hbm_to_vmem [thread:$0]  %s0, 16, %s17, [#allocation3]
    $region5: #{tpu_custom_call.1} parent=1 // pred_fallthru
      _
    // Predicated region
    $region6: #{tpu_custom_call.1} parent=1 // pred_check
      _
    $region7: #{tpu_custom_call.1} parent=1 // pred_check_branch
      %21 = sbr.rel (0) target = $region9
    $region8: #{tpu_custom_call.1} parent=1 // pred_region
      %s23 = ssub.s32 128, 128
      %24 = vsyncadd [#allocation6], %s23
      %s25 = sshll.u32 [#allocation5], 4
      %s26 = int_to_ptr.vmem [resolvable:$true] %s25
      %31 = dma.hbm_to_vmem [thread:$0]  %s1, 128, %s26, [#allocation6], 64, 64, 4
    $region9: #{tpu_custom_call.1} parent=1 // pred_fallthru
      _
    // Predicated region
    $region10: #{tpu_custom_call.1} parent=1 // pred_check
      _
    $region11: #{tpu_custom_call.1} parent=1 // pred_check_branch
      %33 = sbr.rel (0) target = $region13
    $region12: #{tpu_custom_call.1} parent=1 // pred_region
      %34 = dma.done [#allocation3], 16
    $region13: #{tpu_custom_call.1} parent=1 // pred_fallthru
      _
    // Predicated region
    $region14: #{tpu_custom_call.1} parent=1 // pred_check
      _
    $region15: #{tpu_custom_call.1} parent=1 // pred_check_branch
      %36 = sbr.rel (0) target = $region17
    $region16: #{tpu_custom_call.1} parent=1 // pred_region
      %37 = dma.done [#allocation6], 128
    $region17: #{tpu_custom_call.1} parent=1 // pred_fallthru
      _
    %v39 = vld [vmem:[#allocation2] sm:$0x1]
    %v40 = vld [vmem:[#allocation5] sm:$0xf]
    %v41 = vld [vmem:[#allocation5 + $0x4] sm:$0xf]
    %v44 = vunpack.c.l.b16 %v40
    %v45 = vunpack.c.l.b16 %v41
    %v46 = vpack.c.b16 %v45, %v44
    %vm48 = vcmask 130048
    %v50 = vsel %vm48, %v39, 0
    %52 = vmatprep.subr.bf16.mxu0 0
    %53 = vmatpush1.bf16.msra.mxu0 %v46
    %54 = vmatprep.subr.bf16.mxu0 0
    %55 = vmatpush1.bf16.msra.mxu0 0
    %56 = vmatprep.subr.bf16.mxu0 0
    %57 = vmatpush1.bf16.msra.mxu0 0
    %58 = vmatprep.subr.bf16.mxu0 0
    %59 = vmatpush1.bf16.msra.mxu0 0
    %60 = vmatprep.subr.bf16.mxu0 0
    %61 = vmatpush1.bf16.msra.mxu0 0
    %62 = vmatprep.subr.bf16.mxu0 0
    %63 = vmatpush1.bf16.msra.mxu0 0
    %64 = vmatprep.subr.bf16.mxu0 0
    %65 = vmatpush1.bf16.msra.mxu0 0
    %66 = vmatprep.subr.bf16.mxu0 0
    %67 = vmatpush1.bf16.msra.mxu0 0
    %68 = vmatprep.subr.bf16.mxu0 0
    %69 = vmatpush1.bf16.msra.mxu0 0
    %70 = vmatprep.subr.bf16.mxu0 0
    %71 = vmatpush1.bf16.msra.mxu0 0
    %72 = vmatprep.subr.bf16.mxu0 0
    %73 = vmatpush1.bf16.msra.mxu0 0
    %74 = vmatprep.subr.bf16.mxu0 0
    %75 = vmatpush1.bf16.msra.mxu0 0
    %76 = vmatprep.subr.bf16.mxu0 0
    %77 = vmatpush1.bf16.msra.mxu0 0
    %78 = vmatprep.subr.bf16.mxu0 0
    %79 = vmatpush1.bf16.msra.mxu0 0
    %80 = vmatprep.subr.bf16.mxu0 0
    %81 = vmatpush1.bf16.msra.mxu0 0
    %82 = vmatprep.subr.bf16.mxu0 0
    %83 = vmatpush1.bf16.msra.mxu0 0
    %84 = vmatprep.mubr.bf16.mxu0 0
    %85 = vmatmul.mubr.bf16.gmra.mrb[0].mxu0 %v50
    %v86 = vpop.f32.mrb[0].mxu0
    %v87 = vadd.f32 0.0, %v86
    %v88 = vpop.f32.mrb[0].mxu0
    %v89 = vpop.f32.mrb[0].mxu0
    %v90 = vpop.f32.mrb[0].mxu0
    %91 = vdwg.mxu0
    %92 = vst [vmem:[#allocation7] sm:$0x1] %v87
    // Predicated region
    $region18: #{tpu_custom_call.1} parent=1 // pred_check
      _
    $region19: #{tpu_custom_call.1} parent=1 // pred_check_branch
      %94 = sbr.rel (0) target = $region21
    $region20: #{tpu_custom_call.1} parent=1 // pred_region
      %s96 = ssub.s32 16, 16
      %97 = vsyncadd [#allocation4], %s96
      %s99 = sshll.u32 [#allocation7], 4
      %s100 = int_to_ptr.vmem [resolvable:$true] %s99
      %102 = dma.vmem_to_hbm [thread:$0]  %s100, 16, %s2, [#allocation4]
    $region21: #{tpu_custom_call.1} parent=1 // pred_fallthru
      _
    // Predicated region
    $region22: #{tpu_custom_call.1} parent=1 // pred_check
      _
    $region23: #{tpu_custom_call.1} parent=1 // pred_check_branch
      %104 = sbr.rel (0) target = $region25
    $region24: #{tpu_custom_call.1} parent=1 // pred_region
      %105 = dma.done [#allocation4], 16
    $region25: #{tpu_custom_call.1} parent=1 // pred_fallthru
      _
    %106 = vsyncpa [#allocation3], 1
    %107 = vsyncpa [#allocation6], 1
    %108 = vsyncpa [#allocation4], 1

</llo_original>
